<compile_context>
chip_gen: v5e
topology: v5e:2x2
jax: 0.10.0
libtpu: 0.0.40
codegen_flags: <defaults>
</compile_context>

<pallas_src>
import jax
import jax.numpy as jnp
import numpy as np
from jax import lax
from jax.experimental import pallas as pl
from jax.experimental.pallas import tpu as pltpu


# ----------------------------------------------------------------------------------
# Fused kernel: weighted render loss + look_at_rotation
#
# Grid: (num_shards [parallel], n_tiles [arbitrary])
# Inputs (per grid step (c, i)):
#   cam_ref    : (3,)  f32 in SMEM                 camera position parameter
#   render_ref : (tile_rows, W*4)  combined render: RGB lanes = textured render RGB,
#                                  alpha lanes (lane % 4 == 3) = silhouette render alpha
#   ref_ref    : (tile_rows, W*4)  packed reference: RGB lanes = image_ref_textured,
#                                  alpha lanes = image_ref_silhouette
# Outputs (per-shard (8,128) blocks, lane-dense stores):
#   loss_ref : partial  w_sil*SSE(alpha) + w_tex*SSE(rgb)  broadcast over the block
#   r_ref    : R row-major in lanes 0..8 of sublane 0 (every sublane identical)
# Scratch:
#   acc_ref  : (tile_rows, W*4) f32 vreg-shaped accumulator (no per-step reduce)
# ----------------------------------------------------------------------------------
def _make_fused_kernel(w_sil, w_tex):
    w_sil = np.float32(w_sil)
    w_tex = np.float32(w_tex)
    eps2 = np.float32(1e-10)  # normalize(v) = v / max(|v|,1e-5) == v * rsqrt(max(|v|^2,1e-10))

    def kernel(cam_ref, render_ref, ref_ref, loss_ref, r_ref, acc_ref):
        i = pl.program_id(1)

        # ---- first step of each shard: zero accumulator + emit rotation matrix ----
        @pl.when(i == 0)
        def _():
            acc_ref[...] = jnp.zeros_like(acc_ref)

            def ftile(s):
                return jnp.full((8, 128), s, dtype=jnp.float32)

            cx, cy, cz = ftile(cam_ref[0]), ftile(cam_ref[1]), ftile(cam_ref[2])

            # z_axis = normalize(at - cam), at = (0,0,0)
            zx, zy, zz = -cx, -cy, -cz
            inv = lax.rsqrt(jnp.maximum(zx * zx + zy * zy + zz * zz, eps2))
            zx, zy, zz = zx * inv, zy * inv, zz * inv

            # x_axis = normalize(cross(up, z)), up = (0,1,0)  ->  raw = (zz, 0, -zx)
            xr0, xr1, xr2 = zz, jnp.zeros_like(zz), -zx
            inv = lax.rsqrt(jnp.maximum(xr0 * xr0 + xr1 * xr1 + xr2 * xr2, eps2))
            xx, xy, xz = xr0 * inv, xr1 * inv, xr2 * inv

            # y_axis = normalize(cross(z, x))
            yr0 = zy * xz - zz * xy
            yr1 = zz * xx - zx * xz
            yr2 = zx * xy - zy * xx
            inv = lax.rsqrt(jnp.maximum(yr0 * yr0 + yr1 * yr1 + yr2 * yr2, eps2))
            yx, yy, yz = yr0 * inv, yr1 * inv, yr2 * inv

            # degenerate case (camera along up): x <- normalize(cross(y, z))
            is_close = ((jnp.abs(xx) <= 5e-3) & (jnp.abs(xy) <= 5e-3)
                        & (jnp.abs(xz) <= 5e-3))
            rr0 = yy * zz - yz * zy
            rr1 = yz * zx - yx * zz
            rr2 = yx * zy - yy * zx
            inv = lax.rsqrt(jnp.maximum(rr0 * rr0 + rr1 * rr1 + rr2 * rr2, eps2))
            xx = jnp.where(is_close, rr0 * inv, xx)
            xy = jnp.where(is_close, rr1 * inv, xy)
            xz = jnp.where(is_close, rr2 * inv, xz)

            # R = transpose([x; y; z]) -> columns are (x, y, z); flatten row-major into
            # lanes 0..8 and write with ONE dense (8,128) store (no masked row stores).
            vals = (xx, yx, zx, xy, yy, zy, xz, yz, zz)
            lane = lax.broadcasted_iota(jnp.int32, (8, 128), 1)
            r_tile = jnp.zeros((8, 128), jnp.float32)
            for k, v in enumerate(vals):
                r_tile = jnp.where(lane == k, v, r_tile)
            r_ref[...] = r_tile

        # ---- every step: single weighted squared-error accumulation (VPU only) ----
        # Cast in-kernel (free under the DMA) so bf16 producers need no wrapper cast.
        render = render_ref[...].astype(jnp.float32)
        refc = ref_ref[...].astype(jnp.float32)
        # Block always spans the full W*4 lane dim starting at lane 0, so (lane & 3)==3
        # selects exactly the alpha lanes of the RGBA-interleaved slab.
        lane = lax.broadcasted_iota(jnp.int32, render.shape, 1)
        w_lane = jnp.where((lane & 3) == 3, w_sil, w_tex)
        d = render - refc
        acc_ref[...] += w_lane * (d * d)

        # ---- last step of each shard: one cross-lane+sublane reduce, dense store ----
        @pl.when(i == pl.num_programs(1) - 1)
        def _():
            partial = jnp.sum(acc_ref[...])
            loss_ref[...] = jnp.full(loss_ref.shape, partial, dtype=jnp.float32)

    return kernel


def model_forward(camera_position, render_rgba, ref_rgba,
                  weight_silhouette, weight_texture,
                  vmem_budget_bytes=40 * 1024 * 1024):
    """Fused forward: returns (R (1,3,3), loss scalar).

    render_rgba : (H, W*4) combined render slab (RGB lanes = textured render RGB,
                  alpha lanes = silhouette render alpha), any float dtype.
    ref_rgba    : (H, W*4) packed reference slab (RGB lanes = textured ref,
                  alpha lanes = silhouette ref), any float dtype.

    Tiling: the row stream is split 2-way across the leading "parallel" grid axis
    (uses both v7x TensorCores; a plain sequential outer loop on v5e/v6e), and
    tile_rows is the largest multiple-of-8 divisor of the per-shard rows whose total
    VMEM footprint (2 inputs x 2 pipeline buffers + f32 accumulator) fits
    `vmem_budget_bytes`. vmem_limit_bytes is raised to match (v5e scoped default is
    only 16 MiB) and clamped to 48 MiB so it always fits v7x's 64 MiB physical VMEM.
    """
    H, Wc = render_rgba.shape
    assert ref_rgba.shape == (H, Wc)
    assert Wc % 4 == 0, "lanes must be RGBA-interleaved (W*4)"

    in_itemsize = max(jnp.dtype(render_rgba.dtype).itemsize,
                      jnp.dtype(ref_rgba.dtype).itemsize)

    # 2-way TensorCore sharding needs each shard's row count to be a multiple of 8.
    num_shards = 2 if (H % 16 == 0) else 1
    rows_per_shard = H // num_shards

    def _block_bytes(rows):
        # 2 inputs x 2 pipeline buffers (input dtype) + 1 f32 accumulator
        return rows * Wc * (4 * in_itemsize + 4)

    cands = [d for d in range(8, rows_per_shard + 1, 8) if rows_per_shard % d == 0]
    if not cands:
        # H not a multiple of 8: the shard is the whole (small) image -> one full block.
        tile_rows = rows_per_shard
    else:
        fit = [d for d in cands if _block_bytes(d) <= vmem_budget_bytes]
        tile_rows = max(fit) if fit else min(cands)
    n_tiles = rows_per_shard // tile_rows
    grid = (num_shards, n_tiles)

    # Raise scoped VMEM to cover the footprint; clamp for v7x headroom.
    vmem_limit = int(min(max(_block_bytes(tile_rows) + (4 << 20), 16 << 20), 48 << 20))

    img_spec = pl.BlockSpec((tile_rows, Wc), lambda c, i: (c * n_tiles + i, 0))

    loss_slab, r_slab = pl.pallas_call(
        _make_fused_kernel(weight_silhouette, weight_texture),
        out_shape=(jax.ShapeDtypeStruct((num_shards * 8, 128), jnp.float32),
                   jax.ShapeDtypeStruct((num_shards * 8, 128), jnp.float32)),
        grid=grid,
        in_specs=[
            pl.BlockSpec(memory_space=pltpu.MemorySpace.SMEM),  # camera position
            img_spec,   # combined render slab
            img_spec,   # packed reference slab
        ],
        out_specs=[
            pl.BlockSpec((8, 128), lambda c, i: (c, 0)),   # per-shard partial loss
            pl.BlockSpec((8, 128), lambda c, i: (c, 0)),   # per-shard copy of R
        ],
        scratch_shapes=[pltpu.VMEM((tile_rows, Wc), jnp.float32)],
        compiler_params=pltpu.CompilerParams(
            dimension_semantics=("parallel", "arbitrary"),
            vmem_limit_bytes=vmem_limit),
    )(camera_position.astype(jnp.float32), render_rgba, ref_rgba)

    R = r_slab[0, :9].reshape(1, 3, 3)
    loss = jnp.sum(loss_slab.reshape(num_shards, 8, 128)[:, 0, 0])
    return R, loss


# ----------------------------------------------------------------------------------
# Pure-JAX reference (correctness checking only)
# ----------------------------------------------------------------------------------
def _look_at_rotation_ref(c):
    def normalize(v):
        return v / jnp.maximum(jnp.linalg.norm(v), 1e-5)
    z = normalize(-c)
    x = normalize(jnp.cross(jnp.array([0.0, 1.0, 0.0], dtype=c.dtype), z))
    y = normalize(jnp.cross(z, x))
    is_close = jnp.all(jnp.abs(x) <= 5e-3)
    x = jnp.where(is_close, normalize(jnp.cross(y, z)), x)
    return jnp.stack([x, y, z], axis=1)[None]  # (1, 3, 3), columns = x, y, z


if __name__ == "__main__":
    key = jax.random.PRNGKey(0)
    k1, k2, k3 = jax.random.split(key, 3)

    H = W = 16  # small stand-in for the original 256x256 render target

    # Reference RGBA image (stands in for `image_ref` loaded in the original script).
    image_ref = jax.random.uniform(k1, (H, W, 4), dtype=jnp.float32)
    image_ref_silhouette = (image_ref[..., :3].max(-1) != 1.0).astype(jnp.float32)
    image_ref_textured = image_ref[..., :3]

    # "register_buffer"-style one-time precompute: pack both references into one
    # RGBA-aligned slab (RGB lanes = textured ref, alpha lanes = silhouette ref).
    ref_packed = jnp.concatenate(
        [image_ref_textured, image_ref_silhouette[..., None]], axis=-1
    ).reshape(H, W * 4)

    # Camera position parameter exactly as in Model.__init__.
    camera_position = jnp.array([3.0, 6.9, 2.5], dtype=jnp.float32)
    weight_silhouette, weight_texture = 1.0, 1.0

    # TODO(synk): PyTorch3D MeshRenderer / MeshRasterizer / SoftPhongShader (soft
    # rasterization + shading of `self.meshes`) has no clean Pallas equivalent; the
    # rendered RGBA images are provided as synthetic kernel inputs instead.
    image_silhouette = jax.random.uniform(k2, (1, H, W, 4), dtype=jnp.float32)
    image_textured = jax.random.uniform(k3, (1, H, W, 4), dtype=jnp.float32)

    # Renderer output path: ONE combined render slab (RGB lanes = textured render RGB,
    # alpha lanes = silhouette render alpha) so the kernel streams 2 HBM slabs, not 3.
    render_packed = jnp.concatenate(
        [image_textured[0, ..., :3], image_silhouette[0, ..., 3:4]], axis=-1
    ).reshape(H, W * 4)

    # ----------------- fused forward (single pallas_call) -----------------
    R, loss = model_forward(camera_position, render_packed, ref_packed,
                            weight_silhouette, weight_texture)
    jax.block_until_ready((R, loss))

    # correctness checks against pure-JAX references
    R_ref = _look_at_rotation_ref(camera_position)
    loss_ref = (weight_silhouette * jnp.sum((image_silhouette[0, ..., 3]
                                             - image_ref_silhouette) ** 2)
                + weight_texture * jnp.sum((image_textured[0, ..., :3]
                                            - image_ref_textured) ** 2))
    np.testing.assert_allclose(np.asarray(R), np.asarray(R_ref), rtol=1e-4, atol=1e-5)
    np.testing.assert_allclose(float(loss), float(loss_ref), rtol=1e-4, atol=1e-4)

    print("KERNEL_OK")
</pallas_src>

<mosaic_0001>
module attributes {stable_mosaic.version = 11 : i64} {
  func.func @kernel(%arg0: i32, %arg1: i32, %arg2: memref<3xf32, #tpu.memory_space<smem>>, %arg3: memref<8x64xf32, #tpu.memory_space<vmem>>, %arg4: memref<8x64xf32, #tpu.memory_space<vmem>>, %arg5: memref<8x128xf32, #tpu.memory_space<vmem>>, %arg6: memref<8x128xf32, #tpu.memory_space<vmem>>, %arg7: memref<8x64xf32, #tpu.memory_space<vmem>>) attributes {dimension_semantics = [#tpu.dimension_semantics<parallel>, #tpu.dimension_semantics<arbitrary>], iteration_bounds = array<i64: 2, 1>, scalar_prefetch = 0 : i64, scratch_operands = 1 : i64, tpu.core_type = #tpu.core_type<tc>, window_params = [{transform_indices = @transform_0, window_bounds = array<i64: 3>}, {transform_indices = @transform_1, window_bounds = array<i64: 8, 64>}, {transform_indices = @transform_2, window_bounds = array<i64: 8, 64>}, {transform_indices = @transform_3, window_bounds = array<i64: 8, 128>}, {transform_indices = @transform_4, window_bounds = array<i64: 8, 128>}]} {
    %c0_i32 = arith.constant 0 : i32
    %0 = arith.cmpi eq, %arg1, %c0_i32 : i32
    %1 = arith.extui %0 : i1 to i32
    %c0_i32_0 = arith.constant 0 : i32
    %2 = arith.cmpi ne, %1, %c0_i32_0 : i32
    scf.if %2 {
      %cst_12 = arith.constant 0.000000e+00 : f32
      %22 = vector.broadcast %cst_12 : f32 to vector<8x64xf32>
      %c0_13 = arith.constant 0 : index
      %c0_14 = arith.constant 0 : index
      %23 = vector.load %arg7[%c0_13, %c0_14] : memref<8x64xf32, #tpu.memory_space<vmem>>, vector<8x64xf32>
      tpu.vector_store %arg7[%c0_13, %c0_14], %22 {strides = array<i32>} : memref<8x64xf32, #tpu.memory_space<vmem>>, vector<8x64xf32>,
      %c0_15 = arith.constant 0 : index
      %24 = memref.load %arg2[%c0_15] : memref<3xf32, #tpu.memory_space<smem>>
      %25 = vector.broadcast %24 : f32 to vector<8x128xf32>
      %c1 = arith.constant 1 : index
      %26 = memref.load %arg2[%c1] : memref<3xf32, #tpu.memory_space<smem>>
      %27 = vector.broadcast %26 : f32 to vector<8x128xf32>
      %c2 = arith.constant 2 : index
      %28 = memref.load %arg2[%c2] : memref<3xf32, #tpu.memory_space<smem>>
      %29 = vector.broadcast %28 : f32 to vector<8x128xf32>
      %cst_16 = arith.constant 0.000000e+00 : f32
      %30 = vector.broadcast %cst_16 : f32 to vector<8x128xf32>
      %31 = arith.subf %30, %25 : vector<8x128xf32>
      %cst_17 = arith.constant 0.000000e+00 : f32
      %32 = vector.broadcast %cst_17 : f32 to vector<8x128xf32>
      %33 = arith.subf %32, %27 : vector<8x128xf32>
      %cst_18 = arith.constant 0.000000e+00 : f32
      %34 = vector.broadcast %cst_18 : f32 to vector<8x128xf32>
      %35 = arith.subf %34, %29 : vector<8x128xf32>
      %36 = arith.mulf %31, %31 : vector<8x128xf32>
      %37 = arith.mulf %33, %33 : vector<8x128xf32>
      %38 = arith.addf %36, %37 : vector<8x128xf32>
      %39 = arith.mulf %35, %35 : vector<8x128xf32>
      %40 = arith.addf %38, %39 : vector<8x128xf32>
      %cst_19 = arith.constant 1.000000e-10 : f32
      %41 = vector.broadcast %cst_19 : f32 to vector<8x128xf32>
      %42 = arith.maximumf %40, %41 : vector<8x128xf32>
      %43 = math.rsqrt %42 : vector<8x128xf32>
      %44 = arith.mulf %31, %43 : vector<8x128xf32>
      %45 = arith.mulf %33, %43 : vector<8x128xf32>
      %46 = arith.mulf %35, %43 : vector<8x128xf32>
      %cst_20 = arith.constant 0.000000e+00 : f32
      %47 = vector.broadcast %cst_20 : f32 to vector<8x128xf32>
      %cst_21 = arith.constant 0.000000e+00 : f32
      %48 = vector.broadcast %cst_21 : f32 to vector<8x128xf32>
      %49 = arith.subf %48, %44 : vector<8x128xf32>
      %50 = arith.mulf %46, %46 : vector<8x128xf32>
      %51 = arith.mulf %47, %47 : vector<8x128xf32>
      %52 = arith.addf %50, %51 : vector<8x128xf32>
      %53 = arith.mulf %49, %49 : vector<8x128xf32>
      %54 = arith.addf %52, %53 : vector<8x128xf32>
      %cst_22 = arith.constant 1.000000e-10 : f32
      %55 = vector.broadcast %cst_22 : f32 to vector<8x128xf32>
      %56 = arith.maximumf %54, %55 : vector<8x128xf32>
      %57 = math.rsqrt %56 : vector<8x128xf32>
      %58 = arith.mulf %46, %57 : vector<8x128xf32>
      %59 = arith.mulf %47, %57 : vector<8x128xf32>
      %60 = arith.mulf %49, %57 : vector<8x128xf32>
      %61 = arith.mulf %45, %60 : vector<8x128xf32>
      %62 = arith.mulf %46, %59 : vector<8x128xf32>
      %63 = arith.subf %61, %62 : vector<8x128xf32>
      %64 = arith.mulf %46, %58 : vector<8x128xf32>
      %65 = arith.mulf %44, %60 : vector<8x128xf32>
      %66 = arith.subf %64, %65 : vector<8x128xf32>
      %67 = arith.mulf %44, %59 : vector<8x128xf32>
      %68 = arith.mulf %45, %58 : vector<8x128xf32>
      %69 = arith.subf %67, %68 : vector<8x128xf32>
      %70 = arith.mulf %63, %63 : vector<8x128xf32>
      %71 = arith.mulf %66, %66 : vector<8x128xf32>
      %72 = arith.addf %70, %71 : vector<8x128xf32>
      %73 = arith.mulf %69, %69 : vector<8x128xf32>
      %74 = arith.addf %72, %73 : vector<8x128xf32>
      %cst_23 = arith.constant 1.000000e-10 : f32
      %75 = vector.broadcast %cst_23 : f32 to vector<8x128xf32>
      %76 = arith.maximumf %74, %75 : vector<8x128xf32>
      %77 = math.rsqrt %76 : vector<8x128xf32>
      %78 = arith.mulf %63, %77 : vector<8x128xf32>
      %79 = arith.mulf %66, %77 : vector<8x128xf32>
      %80 = arith.mulf %69, %77 : vector<8x128xf32>
      %81 = math.absf %58 : vector<8x128xf32>
      %cst_24 = arith.constant 5.000000e-03 : f32
      %82 = vector.broadcast %cst_24 : f32 to vector<8x128xf32>
      %83 = arith.cmpf ole, %81, %82 : vector<8x128xf32>
      %84 = math.absf %59 : vector<8x128xf32>
      %cst_25 = arith.constant 5.000000e-03 : f32
      %85 = vector.broadcast %cst_25 : f32 to vector<8x128xf32>
      %86 = arith.cmpf ole, %84, %85 : vector<8x128xf32>
      %87 = arith.andi %83, %86 : vector<8x128xi1>
      %88 = math.absf %60 : vector<8x128xf32>
      %cst_26 = arith.constant 5.000000e-03 : f32
      %89 = vector.broadcast %cst_26 : f32 to vector<8x128xf32>
      %90 = arith.cmpf ole, %88, %89 : vector<8x128xf32>
      %91 = arith.andi %87, %90 : vector<8x128xi1>
      %92 = arith.mulf %79, %46 : vector<8x128xf32>
      %93 = arith.mulf %80, %45 : vector<8x128xf32>
      %94 = arith.subf %92, %93 : vector<8x128xf32>
      %95 = arith.mulf %80, %44 : vector<8x128xf32>
      %96 = arith.mulf %78, %46 : vector<8x128xf32>
      %97 = arith.subf %95, %96 : vector<8x128xf32>
      %98 = arith.mulf %78, %45 : vector<8x128xf32>
      %99 = arith.mulf %79, %44 : vector<8x128xf32>
      %100 = arith.subf %98, %99 : vector<8x128xf32>
      %101 = arith.mulf %94, %94 : vector<8x128xf32>
      %102 = arith.mulf %97, %97 : vector<8x128xf32>
      %103 = arith.addf %101, %102 : vector<8x128xf32>
      %104 = arith.mulf %100, %100 : vector<8x128xf32>
      %105 = arith.addf %103, %104 : vector<8x128xf32>
      %cst_27 = arith.constant 1.000000e-10 : f32
      %106 = vector.broadcast %cst_27 : f32 to vector<8x128xf32>
      %107 = arith.maximumf %105, %106 : vector<8x128xf32>
      %108 = math.rsqrt %107 : vector<8x128xf32>
      %109 = arith.mulf %94, %108 : vector<8x128xf32>
      %110 = arith.select %91, %109, %58 : vector<8x128xi1>, vector<8x128xf32>
      %111 = arith.mulf %97, %108 : vector<8x128xf32>
      %112 = arith.select %91, %111, %59 : vector<8x128xi1>, vector<8x128xf32>
      %113 = arith.mulf %100, %108 : vector<8x128xf32>
      %114 = arith.select %91, %113, %60 : vector<8x128xi1>, vector<8x128xf32>
      %115 = tpu.iota {dimensions = array<i32: 1>} : vector<8x128xi32>
      %cst_28 = arith.constant 0.000000e+00 : f32
      %116 = vector.broadcast %cst_28 : f32 to vector<8x128xf32>
      %c0_i32_29 = arith.constant 0 : i32
      %117 = vector.broadcast %c0_i32_29 : i32 to vector<8x128xi32>
      %118 = arith.cmpi eq, %115, %117 : vector<8x128xi32>
      %119 = arith.select %118, %110, %116 : vector<8x128xi1>, vector<8x128xf32>
      %c1_i32 = arith.constant 1 : i32
      %120 = vector.broadcast %c1_i32 : i32 to vector<8x128xi32>
      %121 = arith.cmpi eq, %115, %120 : vector<8x128xi32>
      %122 = arith.select %121, %78, %119 : vector<8x128xi1>, vector<8x128xf32>
      %c2_i32 = arith.constant 2 : i32
      %123 = vector.broadcast %c2_i32 : i32 to vector<8x128xi32>
      %124 = arith.cmpi eq, %115, %123 : vector<8x128xi32>
      %125 = arith.select %124, %44, %122 : vector<8x128xi1>, vector<8x128xf32>
      %c3_i32_30 = arith.constant 3 : i32
      %126 = vector.broadcast %c3_i32_30 : i32 to vector<8x128xi32>
      %127 = arith.cmpi eq, %115, %126 : vector<8x128xi32>
      %128 = arith.select %127, %112, %125 : vector<8x128xi1>, vector<8x128xf32>
      %c4_i32 = arith.constant 4 : i32
      %129 = vector.broadcast %c4_i32 : i32 to vector<8x128xi32>
      %130 = arith.cmpi eq, %115, %129 : vector<8x128xi32>
      %131 = arith.select %130, %79, %128 : vector<8x128xi1>, vector<8x128xf32>
      %c5_i32 = arith.constant 5 : i32
      %132 = vector.broadcast %c5_i32 : i32 to vector<8x128xi32>
      %133 = arith.cmpi eq, %115, %132 : vector<8x128xi32>
      %134 = arith.select %133, %45, %131 : vector<8x128xi1>, vector<8x128xf32>
      %c6_i32 = arith.constant 6 : i32
      %135 = vector.broadcast %c6_i32 : i32 to vector<8x128xi32>
      %136 = arith.cmpi eq, %115, %135 : vector<8x128xi32>
      %137 = arith.select %136, %114, %134 : vector<8x128xi1>, vector<8x128xf32>
      %c7_i32 = arith.constant 7 : i32
      %138 = vector.broadcast %c7_i32 : i32 to vector<8x128xi32>
      %139 = arith.cmpi eq, %115, %138 : vector<8x128xi32>
      %140 = arith.select %139, %80, %137 : vector<8x128xi1>, vector<8x128xf32>
      %c8_i32 = arith.constant 8 : i32
      %141 = vector.broadcast %c8_i32 : i32 to vector<8x128xi32>
      %142 = arith.cmpi eq, %115, %141 : vector<8x128xi32>
      %143 = arith.select %142, %46, %140 : vector<8x128xi1>, vector<8x128xf32>
      %c0_31 = arith.constant 0 : index
      %c0_32 = arith.constant 0 : index
      %144 = vector.load %arg6[%c0_31, %c0_32] : memref<8x128xf32, #tpu.memory_space<vmem>>, vector<8x128xf32>
      tpu.vector_store %arg6[%c0_31, %c0_32], %143 {strides = array<i32>} : memref<8x128xf32, #tpu.memory_space<vmem>>, vector<8x128xf32>,
    } else {
    }
    %c0 = arith.constant 0 : index
    %c0_1 = arith.constant 0 : index
    %3 = vector.load %arg3[%c0, %c0_1] : memref<8x64xf32, #tpu.memory_space<vmem>>, vector<8x64xf32>
    %c0_2 = arith.constant 0 : index
    %c0_3 = arith.constant 0 : index
    %4 = vector.load %arg4[%c0_2, %c0_3] : memref<8x64xf32, #tpu.memory_space<vmem>>, vector<8x64xf32>
    %5 = tpu.iota {dimensions = array<i32: 1>} : vector<8x64xi32>
    %c3_i32 = arith.constant 3 : i32
    %6 = vector.broadcast %c3_i32 : i32 to vector<8x64xi32>
    %7 = arith.andi %5, %6 : vector<8x64xi32>
    %c3_i32_4 = arith.constant 3 : i32
    %8 = vector.broadcast %c3_i32_4 : i32 to vector<8x64xi32>
    %9 = arith.cmpi eq, %7, %8 : vector<8x64xi32>
    %cst = arith.constant 1.000000e+00 : f32
    %cst_5 = arith.constant 1.000000e+00 : f32
    %10 = vector.broadcast %cst : f32 to vector<8x64xf32>
    %11 = vector.broadcast %cst_5 : f32 to vector<8x64xf32>
    %12 = arith.select %9, %10, %11 : vector<8x64xi1>, vector<8x64xf32>
    %13 = arith.subf %3, %4 : vector<8x64xf32>
    %c0_6 = arith.constant 0 : index
    %c0_7 = arith.constant 0 : index
    %14 = vector.load %arg7[%c0_6, %c0_7] : memref<8x64xf32, #tpu.memory_space<vmem>>, vector<8x64xf32>
    %15 = arith.mulf %13, %13 : vector<8x64xf32>
    %16 = arith.mulf %12, %15 : vector<8x64xf32>
    %17 = arith.addf %14, %16 : vector<8x64xf32>
    %c0_8 = arith.constant 0 : index
    %c0_9 = arith.constant 0 : index
    %18 = vector.load %arg7[%c0_8, %c0_9] : memref<8x64xf32, #tpu.memory_space<vmem>>, vector<8x64xf32>
    tpu.vector_store %arg7[%c0_8, %c0_9], %17 {strides = array<i32>} : memref<8x64xf32, #tpu.memory_space<vmem>>, vector<8x64xf32>,
    %c0_i32_10 = arith.constant 0 : i32
    %19 = arith.cmpi eq, %arg1, %c0_i32_10 : i32
    %20 = arith.extui %19 : i1 to i32
    %c0_i32_11 = arith.constant 0 : i32
    %21 = arith.cmpi ne, %20, %c0_i32_11 : i32
    scf.if %21 {
      %c0_12 = arith.constant 0 : index
      %c0_13 = arith.constant 0 : index
      %22 = vector.load %arg7[%c0_12, %c0_13] : memref<8x64xf32, #tpu.memory_space<vmem>>, vector<8x64xf32>
      %23 = vector.shape_cast %22 : vector<8x64xf32> to vector<1x8x64xf32>
      %cst_14 = arith.constant dense<0.000000e+00> : vector<1xf32>
      %24 = vector.multi_reduction <add>, %23, %cst_14 [1, 2] : vector<1x8x64xf32> to vector<1xf32>
      %25 = vector.shape_cast %24 : vector<1xf32> to vector<1x1x1xf32>
      %26 = vector.extract %25[0, 0, 0] : f32 from vector<1x1x1xf32>
      %27 = vector.broadcast %26 : f32 to vector<8x128xf32>
      %c0_15 = arith.constant 0 : index
      %c0_16 = arith.constant 0 : index
      %28 = vector.load %arg5[%c0_15, %c0_16] : memref<8x128xf32, #tpu.memory_space<vmem>>, vector<8x128xf32>
      tpu.vector_store %arg5[%c0_15, %c0_16], %27 {strides = array<i32>} : memref<8x128xf32, #tpu.memory_space<vmem>>, vector<8x128xf32>,
    } else {
    }
    return
  }
  func.func @transform_0(%arg0: i32, %arg1: i32) -> i32 {
    %c0_i32 = arith.constant 0 : i32
    %c0_i32_0 = arith.constant 0 : i32
    return %c0_i32 : i32
  }
  func.func @transform_1(%arg0: i32, %arg1: i32) -> (i32, i32) {
    %c1_i32 = arith.constant 1 : i32
    %0 = arith.muli %arg0, %c1_i32 : i32
    %1 = arith.addi %0, %arg1 : i32
    %c0_i32 = arith.constant 0 : i32
    %c0_i32_0 = arith.constant 0 : i32
    return %1, %c0_i32 : i32, i32
  }
  func.func @transform_2(%arg0: i32, %arg1: i32) -> (i32, i32) {
    %c1_i32 = arith.constant 1 : i32
    %0 = arith.muli %arg0, %c1_i32 : i32
    %1 = arith.addi %0, %arg1 : i32
    %c0_i32 = arith.constant 0 : i32
    %c0_i32_0 = arith.constant 0 : i32
    return %1, %c0_i32 : i32, i32
  }
  func.func @transform_3(%arg0: i32, %arg1: i32) -> (i32, i32) {
    %c0_i32 = arith.constant 0 : i32
    %c0_i32_0 = arith.constant 0 : i32
    return %arg0, %c0_i32 : i32, i32
  }
  func.func @transform_4(%arg0: i32, %arg1: i32) -> (i32, i32) {
    %c0_i32 = arith.constant 0 : i32
    %c0_i32_0 = arith.constant 0 : i32
    return %arg0, %c0_i32 : i32, i32
  }
}

</mosaic_0001>

<llo_original>
// kernel: tpu_custom_call.1
$region0: #{tpu_custom_call.1}
  #allocation0 [shape = 'u32[]', space=smem, size = 0x4, offset = 0x4, fixed_abs, tag = 'smem constant byte address 0x4 - core index']
  #allocation1 [shape = 'u32[72,128]{1,0:T(1,128)}', space=vmem, size = 0x9000, scoped, tag = 'internal scratch']
  #allocation2 [shape = 'f32[8,64]{1,0:T(8,128)}', space=vmem, size = 0x1000, scoped, tag = 'scratch operand']
  %s0 = inlined_call_operand.hbm [shape: f32[3], index: 0, kind: input, shape index: {}]
  %s1 = inlined_call_operand.hbm [shape: f32[16,64], index: 1, kind: input, shape index: {}]
  %s2 = inlined_call_operand.hbm [shape: f32[16,64], index: 2, kind: input, shape index: {}]
  %s3 = inlined_call_operand.hbm [shape: f32[16,128], index: 3, kind: output, shape index: {0}]
  %s4 = inlined_call_operand.hbm [shape: f32[16,128], index: 4, kind: output, shape index: {1}]
  %5 = xla_tuple %s3, %s4
  %s6 = sld [smem:[#allocation0]]
  $region73: #{tpu_custom_call.1} parent=0
    _
  %s8 = ssub.s32 1, %s6
  %s9 = scalar_select 0, %s8, %s6
  $region1: #{tpu_custom_call.1} parent=0
    #allocation3 [shape = 'u8[512]{0}', space=smem, size = 0x200, scoped, tag = 'input window, operand 0, single buffered']
    #allocation4 [shape = 's32[2]{0}', space=sflag, size = 0x8, scoped, tag = 'scoped memory for tpu_custom_call.1']
    #allocation5 [shape = 's32[2]{0}', space=sflag, size = 0x8, scoped, tag = 'scoped memory for tpu_custom_call.1']
    #allocation6 [shape = 's32[2]{0}', space=sflag, size = 0x8, scoped, tag = 'scoped memory for tpu_custom_call.1']
    #allocation7 [shape = 'u8[8192]{0}', space=vmem, size = 0x2000, scoped, tag = 'input window, operand 1']
    #allocation8 [shape = 'u8[8192]{0}', space=vmem, size = 0x2000, scoped, tag = 'input window, operand 2']
    #allocation9 [shape = 's32[2]{0}', space=sflag, size = 0x8, scoped, tag = 'scoped memory for tpu_custom_call.1']
    #allocation10 [shape = 'u8[8192]{0}', space=vmem, size = 0x2000, scoped, tag = 'output window, operand 0']
    #allocation11 [shape = 'u8[8192]{0}', space=vmem, size = 0x2000, scoped, tag = 'output window, operand 1']
    #allocation12 [shape = 's32[2]{0}', space=sflag, size = 0x8, scoped, tag = 'scoped memory for tpu_custom_call.1']
    %10 = vsyncpa [#allocation6], 0
    %11 = vsyncpa [#allocation4], 0
    %s12 = scalar_lea.sflag [#allocation4], 1
    %13 = vsyncpa %s12, 0
    %14 = vsyncpa [#allocation9], 0
    %s15 = scalar_lea.sflag [#allocation9], 1
    %16 = vsyncpa %s15, 0
    %17 = vsyncpa [#allocation5], 0
    %s18 = scalar_lea.sflag [#allocation5], 1
    %19 = vsyncpa %s18, 0
    %20 = vsyncpa [#allocation12], 0
    %s21 = scalar_lea.sflag [#allocation12], 1
    %22 = vsyncpa %s21, 0
    loop: start=0, step=1, limit=4
    $region2: #{tpu_custom_call.1} parent=1 // loop_pre_header
      _
    $region3: #{tpu_custom_call.1} parent=1 // loop_header
      %s24 = sphi 0, %s28
      %p25 = scmp.ge.s32.totalorder %s24, 4
      %s31 = sphi 0, %s43
      %s32 = sphi 0, %s39
      %s33 = sphi 0, %s31
      %s34 = sphi 0, %s32
      %s35 = sphi 0, %s33
      %s36 = sphi 0, %s34
      %s44 = sphi 0, %s44
      %s46 = sphi 0, %s44
      %s47 = sphi 0, %s46
      %s61 = sphi 0, %s47
      %s69 = sphi 0, %s71
      %s72 = sphi 0, %s69
      %s73 = sphi 0, %s72
      %s89 = sphi 0, %s73
      %s97 = sphi 0, %s99
      %s100 = sphi 0, %s97
      %s101 = sphi 0, %s100
      %s117 = sphi 0, %s101
      %s123 = sphi 0, %s125
      %s126 = sphi 0, %s123
      %s127 = sphi 0, %s126
      %s143 = sphi 0, %s127
      %s149 = sphi 0, %s151
      %s152 = sphi 0, %s149
      %s153 = sphi 0, %s152
      %s169 = sphi 0, %s153
    $region4: #{tpu_custom_call.1} parent=1 // loop_header_branch
      %27 = sbr.rel (%p25) target = $region8
    $region5: #{tpu_custom_call.1} parent=1 // loop_body
      %s29 = ssub.s32 %s24, 1
      %s30 = ssub.s32 %s24, 2
      %s37 = sadd.s32 1, %s32
      %p38 = scmp.ge.s32.totalorder %s37, 1
      %s39 = scalar_select %p38, 0, %s37
      %s40 = sadd.s32 1, %s31
      %s41 = scalar_select %p38, %s40, %s31
      %p42 = scmp.ge.s32.totalorder %s41, 2
      %s43 = scalar_select %p42, 0, %s41
      %s45 = sadd.s32 %s44, 1
      %p48 = scmp.eq.s32.totalorder %s24, 1
      %p49 = scmp.ne.s32.totalorder %s44, %s46
      %p50 = scmp.eq.s32.totalorder %s24, 0
      %p51 = por %p49, %p50
      %p52 = scmp.ne.s32.totalorder %s44, %s46
      %p53 = scmp.eq.s32.totalorder %s29, 1
      %p54 = por %p52, %p53
      %p55 = scmp.ne.s32.totalorder %s46, %s47
      %p56 = scmp.eq.s32.totalorder %s29, 0
      %p57 = por %p55, %p56
      %p58 = scmp.ne.s32.totalorder %s46, %s47
      %p59 = scmp.eq.s32.totalorder %s30, 1
      %p60 = por %p58, %p59
      %p62 = scmp.ne.s32.totalorder %s47, %s61
      %p63 = scmp.eq.s32.totalorder %s30, 0
      %p64 = por %p62, %p63
      %s65 = sadd.s32 %s31, %s32
      %s66 = sadd.s32 %s43, %s39
      %s67 = ssub.s32 %s65, %s66
      %p68 = scmp.eq.s32.totalorder %s67, 0
      %s70 = sadd.s32 %s69, 1
      %s71 = scalar_select %p68, %s69, %s70
      %p74 = pneg %p68
      %p75 = scmp.eq.s32.totalorder %s24, 1
      %p76 = por %p74, %p75
      %p77 = scmp.ne.s32.totalorder %s69, %s72
      %p78 = scmp.eq.s32.totalorder %s24, 0
      %p79 = por %p77, %p78
      %p80 = scmp.ne.s32.totalorder %s69, %s72
      %p81 = scmp.eq.s32.totalorder %s29, 1
      %p82 = por %p80, %p81
      %p83 = scmp.ne.s32.totalorder %s72, %s73
      %p84 = scmp.eq.s32.totalorder %s29, 0
      %p85 = por %p83, %p84
      %p86 = scmp.ne.s32.totalorder %s72, %s73
      %p87 = scmp.eq.s32.totalorder %s30, 1
      %p88 = por %p86, %p87
      %p90 = scmp.ne.s32.totalorder %s73, %s89
      %p91 = scmp.eq.s32.totalorder %s30, 0
      %p92 = por %p90, %p91
      %s93 = sadd.s32 %s31, %s32
      %s94 = sadd.s32 %s43, %s39
      %s95 = ssub.s32 %s93, %s94
      %p96 = scmp.eq.s32.totalorder %s95, 0
      %s98 = sadd.s32 %s97, 1
      %s99 = scalar_select %p96, %s97, %s98
      %p102 = pneg %p96
      %p103 = scmp.eq.s32.totalorder %s24, 1
      %p104 = por %p102, %p103
      %p105 = scmp.ne.s32.totalorder %s97, %s100
      %p106 = scmp.eq.s32.totalorder %s24, 0
      %p107 = por %p105, %p106
      %p108 = scmp.ne.s32.totalorder %s97, %s100
      %p109 = scmp.eq.s32.totalorder %s29, 1
      %p110 = por %p108, %p109
      %p111 = scmp.ne.s32.totalorder %s100, %s101
      %p112 = scmp.eq.s32.totalorder %s29, 0
      %p113 = por %p111, %p112
      %p114 = scmp.ne.s32.totalorder %s100, %s101
      %p115 = scmp.eq.s32.totalorder %s30, 1
      %p116 = por %p114, %p115
      %p118 = scmp.ne.s32.totalorder %s101, %s117
      %p119 = scmp.eq.s32.totalorder %s30, 0
      %p120 = por %p118, %p119
      %s121 = ssub.s32 %s31, %s43
      %p122 = scmp.eq.s32.totalorder %s121, 0
      %s124 = sadd.s32 %s123, 1
      %s125 = scalar_select %p122, %s123, %s124
      %p128 = pneg %p122
      %p129 = scmp.eq.s32.totalorder %s24, 1
      %p130 = por %p128, %p129
      %p131 = scmp.ne.s32.totalorder %s123, %s126
      %p132 = scmp.eq.s32.totalorder %s24, 0
      %p133 = por %p131, %p132
      %p134 = scmp.ne.s32.totalorder %s123, %s126
      %p135 = scmp.eq.s32.totalorder %s29, 1
      %p136 = por %p134, %p135
      %p137 = scmp.ne.s32.totalorder %s126, %s127
      %p138 = scmp.eq.s32.totalorder %s29, 0
      %p139 = por %p137, %p138
      %p140 = scmp.ne.s32.totalorder %s126, %s127
      %p141 = scmp.eq.s32.totalorder %s30, 1
      %p142 = por %p140, %p141
      %p144 = scmp.ne.s32.totalorder %s127, %s143
      %p145 = scmp.eq.s32.totalorder %s30, 0
      %p146 = por %p144, %p145
      %s147 = ssub.s32 %s31, %s43
      %p148 = scmp.eq.s32.totalorder %s147, 0
      %s150 = sadd.s32 %s149, 1
      %s151 = scalar_select %p148, %s149, %s150
      %p154 = pneg %p148
      %p155 = scmp.eq.s32.totalorder %s24, 1
      %p156 = por %p154, %p155
      %p157 = scmp.ne.s32.totalorder %s149, %s152
      %p158 = scmp.eq.s32.totalorder %s24, 0
      %p159 = por %p157, %p158
      %p160 = scmp.ne.s32.totalorder %s149, %s152
      %p161 = scmp.eq.s32.totalorder %s29, 1
      %p162 = por %p160, %p161
      %p163 = scmp.ne.s32.totalorder %s152, %s153
      %p164 = scmp.eq.s32.totalorder %s29, 0
      %p165 = por %p163, %p164
      %p166 = scmp.ne.s32.totalorder %s152, %s153
      %p167 = scmp.eq.s32.totalorder %s30, 1
      %p168 = por %p166, %p167
      %p170 = scmp.ne.s32.totalorder %s153, %s169
      %p171 = scmp.eq.s32.totalorder %s30, 0
      %p172 = por %p170, %p171
      %p173 = scmp.le.s32.totalorder 1, %s24
      %p174 = scmp.lt.s32.totalorder %s24, 3
      %p175 = pnand %p173, %p174
      %p176 = pneg %p175
      // Predicated region
      $region9: #{tpu_custom_call.1} parent=5 // pred_check
        _
      $region10: #{tpu_custom_call.1} parent=5 // pred_check_branch
        %178 = sbr.rel (%p175) target = $region12
      $region11: #{tpu_custom_call.1} parent=5 // pred_region
        %s179 = ssub.s32 %s24, 1
        // Predicated region
        $region13: #{tpu_custom_call.1} parent=11 // pred_check
          %p180 = pneg %p57
        $region14: #{tpu_custom_call.1} parent=11 // pred_check_branch
          %182 = sbr.rel (%p180) target = $region16
        $region15: #{tpu_custom_call.1} parent=11 // pred_region
          %184 = vsyncadd [#allocation6], 0
          %s186 = sshll.u32 %s0, 4
          %s187 = int_to_ptr.hbm [resolvable:$true] %s186
          %189 = dma.hbm_to_smem %s187, 16, [#allocation3], [#allocation6]
        $region16: #{tpu_custom_call.1} parent=11 // pred_fallthru
          _
      $region12: #{tpu_custom_call.1} parent=5 // pred_fallthru
        _
      %p190 = scmp.lt.s32.totalorder %s24, 2
      // Predicated region
      $region17: #{tpu_custom_call.1} parent=5 // pred_check
        %p191 = pneg %p190
      $region18: #{tpu_custom_call.1} parent=5 // pred_check_branch
        %193 = sbr.rel (%p191) target = $region20
      $region19: #{tpu_custom_call.1} parent=5 // pred_region
        // Predicated region
        $region21: #{tpu_custom_call.1} parent=19 // pred_check
          %p194 = pneg %p79
        $region22: #{tpu_custom_call.1} parent=19 // pred_check_branch
          %196 = sbr.rel (%p194) target = $region24
        $region23: #{tpu_custom_call.1} parent=19 // pred_region
          %s197 = sand.u32 %s69, 1
          %s198 = scalar_lea.sflag [#allocation4], %s197
          %s199 = sand.u32 %s69, 1
          %s200 = smul.addr %s199, 8
          %s201 = scalar_lea.vmem [#allocation7], %s200
          %s202 = sadd.s32 %s31, %s32
          %204 = vsyncadd %s198, 0
          %s205 = smul.addr %s202, 8
          %s206 = scalar_lea.hbm %s1, %s205
          %s208 = sshll.u32 %s206, 4
          %s209 = int_to_ptr.hbm [resolvable:$true] %s208
          %s210 = sshll.u32 %s201, 4
          %s211 = int_to_ptr.vmem [resolvable:$true] %s210
          %213 = dma.hbm_to_vmem [thread:$0]  %s209, 128, %s211, %s198
        $region24: #{tpu_custom_call.1} parent=19 // pred_fallthru
          _
        // Predicated region
        $region25: #{tpu_custom_call.1} parent=19 // pred_check
          %p214 = pneg %p107
        $region26: #{tpu_custom_call.1} parent=19 // pred_check_branch
          %216 = sbr.rel (%p214) target = $region28
        $region27: #{tpu_custom_call.1} parent=19 // pred_region
          %s217 = sand.u32 %s97, 1
          %s218 = scalar_lea.sflag [#allocation9], %s217
          %s219 = sand.u32 %s97, 1
          %s220 = smul.addr %s219, 8
          %s221 = scalar_lea.vmem [#allocation8], %s220
          %s222 = sadd.s32 %s31, %s32
          %224 = vsyncadd %s218, 0
          %s225 = smul.addr %s222, 8
          %s226 = scalar_lea.hbm %s2, %s225
          %s228 = sshll.u32 %s226, 4
          %s229 = int_to_ptr.hbm [resolvable:$true] %s228
          %s230 = sshll.u32 %s221, 4
          %s231 = int_to_ptr.vmem [resolvable:$true] %s230
          %233 = dma.hbm_to_vmem [thread:$0]  %s229, 128, %s231, %s218
        $region28: #{tpu_custom_call.1} parent=19 // pred_fallthru
          _
      $region20: #{tpu_custom_call.1} parent=5 // pred_fallthru
        _
      %p234 = scmp.le.s32.totalorder 1, %s24
      %p235 = scmp.lt.s32.totalorder %s24, 3
      %p236 = pnand %p234, %p235
      %p237 = pneg %p236
      // Predicated region
      $region29: #{tpu_custom_call.1} parent=5 // pred_check
        _
      $region30: #{tpu_custom_call.1} parent=5 // pred_check_branch
        %239 = sbr.rel (%p236) target = $region32
      $region31: #{tpu_custom_call.1} parent=5 // pred_region
        %s240 = ssub.s32 %s24, 1
        // Predicated region
        $region33: #{tpu_custom_call.1} parent=31 // pred_check
          %p241 = pneg %p57
        $region34: #{tpu_custom_call.1} parent=31 // pred_check_branch
          %243 = sbr.rel (%p241) target = $region36
        $region35: #{tpu_custom_call.1} parent=31 // pred_region
          %245 = dma.done [#allocation6], 16
        $region36: #{tpu_custom_call.1} parent=31 // pred_fallthru
          _
        %s246 = sand.u32 %s72, 1
        %s247 = scalar_lea.sflag [#allocation4], %s246
        %s248 = sand.u32 %s72, 1
        %s249 = smul.addr %s248, 8
        %s250 = scalar_lea.vmem [#allocation7], %s249
        // Predicated region
        $region37: #{tpu_custom_call.1} parent=31 // pred_check
          %p251 = pneg %p85
        $region38: #{tpu_custom_call.1} parent=31 // pred_check_branch
          %253 = sbr.rel (%p251) target = $region40
        $region39: #{tpu_custom_call.1} parent=31 // pred_region
          %255 = dma.done %s247, 128
        $region40: #{tpu_custom_call.1} parent=31 // pred_fallthru
          _
        %s256 = sand.u32 %s100, 1
        %s257 = scalar_lea.sflag [#allocation9], %s256
        %s258 = sand.u32 %s100, 1
        %s259 = smul.addr %s258, 8
        %s260 = scalar_lea.vmem [#allocation8], %s259
        // Predicated region
        $region41: #{tpu_custom_call.1} parent=31 // pred_check
          %p261 = pneg %p113
        $region42: #{tpu_custom_call.1} parent=31 // pred_check_branch
          %263 = sbr.rel (%p261) target = $region44
        $region43: #{tpu_custom_call.1} parent=31 // pred_region
          %265 = dma.done %s257, 128
        $region44: #{tpu_custom_call.1} parent=31 // pred_fallthru
          _
        %266 = sfence
        %p267 = pneg %p57
        %p268 = pneg %p54
        %s269 = sand.u32 %s72, 1
        %s270 = scalar_lea.sflag [#allocation4], %s269
        %s271 = sand.u32 %s72, 1
        %s272 = smul.addr %s271, 8
        %s273 = scalar_lea.vmem [#allocation7], %s272
        %p274 = pneg %p85
        %p275 = pneg %p82
        %s276 = sand.u32 %s100, 1
        %s277 = scalar_lea.sflag [#allocation9], %s276
        %s278 = sand.u32 %s100, 1
        %s279 = smul.addr %s278, 8
        %s280 = scalar_lea.vmem [#allocation8], %s279
        %p281 = pneg %p113
        %p282 = pneg %p110
        %p283 = pneg %p139
        %p284 = pneg %p136
        %s285 = sand.u32 %s126, 1
        %s286 = scalar_lea.sflag [#allocation5], %s285
        %s287 = sand.u32 %s126, 1
        %s288 = smul.addr %s287, 8
        %s289 = scalar_lea.vmem [#allocation10], %s288
        %p290 = pneg %p165
        %p291 = pneg %p162
        %s292 = sand.u32 %s152, 1
        %s293 = scalar_lea.sflag [#allocation12], %s292
        %s294 = sand.u32 %s152, 1
        %s295 = smul.addr %s294, 8
        %s296 = scalar_lea.vmem [#allocation11], %s295
        %s297 = sadd.s32 %s33, %s34
        %s298 = sadd.s32 %s33, %s34
        %p299 = scmp.eq.s32.totalorder %s34, 0
        // Predicated region
        $region45: #{tpu_custom_call.1} parent=31 // pred_check
          %p300 = pneg %p299
        $region46: #{tpu_custom_call.1} parent=31 // pred_check_branch
          %302 = sbr.rel (%p300) target = $region48
        $region47: #{tpu_custom_call.1} parent=31 // pred_region
          %vm303 = vcmask 523264
          %304 = vst.msk [vmem:[#allocation2] sm:$0xff] %vm303, 0.0
          %s305 = sld [smem:[#allocation3]]
          %v306 = vstv %s305
          %s307 = sld [smem:[#allocation3 + $0x1]]
          %v308 = vstv %s307
          %s309 = sld [smem:[#allocation3 + $0x2]]
          %v310 = vstv %s309
          %v311 = vsub.f32 0.0, %v306
          %v312 = vsub.f32 0.0, %v308
          %v313 = vsub.f32 0.0, %v310
          %v314 = vmul.f32 %v311, %v311
          %v315 = vmul.f32 %v312, %v312
          %v316 = vadd.f32 %v314, %v315
          %v317 = vmul.f32 %v313, %v313
          %v318 = vadd.f32 %v316, %v317
          %v319 = vmax.f32 %v318, 1e-10
          %v320 = vrsqrt.pop %v319
          %v321 = vmul.f32 %v320, %v319
          %v322 = vmul.f32 %v321, %v320
          %v323 = vmul.f32 0.5, %v322
          %v324 = vsub.f32 1.5, %v323
          %v325 = vmul.f32 %v320, %v324
          %vm326 = vweird.f32 %v319
          %vm327 = vweird.f32 %v320
          %vm328 = vmor %vm326, %vm327
          %v329 = vsel %vm328, %v320, %v325
          %v330 = vmul.f32 %v311, %v329
          %v331 = vmul.f32 %v312, %v329
          %v332 = vmul.f32 %v313, %v329
          %v333 = vsub.f32 0.0, %v330
          %v334 = vmul.f32 %v332, %v332
          %v335 = vadd.f32 %v334, 0.0
          %v336 = vmul.f32 %v333, %v333
          %v337 = vadd.f32 %v335, %v336
          %v338 = vmax.f32 %v337, 1e-10
          %v339 = vrsqrt.pop %v338
          %v340 = vmul.f32 %v339, %v338
          %v341 = vmul.f32 %v340, %v339
          %v342 = vmul.f32 0.5, %v341
          %v343 = vsub.f32 1.5, %v342
          %v344 = vmul.f32 %v339, %v343
          %vm345 = vweird.f32 %v338
          %vm346 = vweird.f32 %v339
          %vm347 = vmor %vm345, %vm346
          %v348 = vsel %vm347, %v339, %v344
          %v349 = vmul.f32 %v332, %v348
          %v350 = vmul.f32 %v348, 0.0
          %v351 = vmul.f32 %v333, %v348
          %v352 = vmul.f32 %v331, %v351
          %v353 = vmul.f32 %v332, %v350
          %v354 = vsub.f32 %v352, %v353
          %v355 = vmul.f32 %v332, %v349
          %v356 = vmul.f32 %v330, %v351
          %v357 = vsub.f32 %v355, %v356
          %v358 = vmul.f32 %v330, %v350
          %v359 = vmul.f32 %v331, %v349
          %v360 = vsub.f32 %v358, %v359
          %v361 = vmul.f32 %v354, %v354
          %v362 = vmul.f32 %v357, %v357
          %v363 = vadd.f32 %v361, %v362
          %v364 = vmul.f32 %v360, %v360
          %v365 = vadd.f32 %v363, %v364
          %v366 = vmax.f32 %v365, 1e-10
          %v367 = vrsqrt.pop %v366
          %v368 = vmul.f32 %v367, %v366
          %v369 = vmul.f32 %v368, %v367
          %v370 = vmul.f32 0.5, %v369
          %v371 = vsub.f32 1.5, %v370
          %v372 = vmul.f32 %v367, %v371
          %vm373 = vweird.f32 %v366
          %vm374 = vweird.f32 %v367
          %vm375 = vmor %vm373, %vm374
          %v376 = vsel %vm375, %v367, %v372
          %v377 = vmul.f32 %v354, %v376
          %v378 = vmul.f32 %v357, %v376
          %v379 = vmul.f32 %v360, %v376
          %v380 = vand.u32 2147483647, %v349
          %vm381 = vcmp.le.f32.partialorder %v380, 0.005
          %v382 = vand.u32 2147483647, %v350
          %vm383 = vcmp.le.f32.partialorder %v382, 0.005
          %vm384 = vmand %vm381, %vm383
          %v385 = vand.u32 2147483647, %v351
          %vm386 = vcmp.le.f32.partialorder %v385, 0.005
          %vm387 = vmand %vm384, %vm386
          %v388 = vmul.f32 %v378, %v332
          %v389 = vmul.f32 %v379, %v331
          %v390 = vsub.f32 %v388, %v389
          %v391 = vmul.f32 %v379, %v330
          %v392 = vmul.f32 %v377, %v332
          %v393 = vsub.f32 %v391, %v392
          %v394 = vmul.f32 %v377, %v331
          %v395 = vmul.f32 %v378, %v330
          %v396 = vsub.f32 %v394, %v395
          %v397 = vmul.f32 %v390, %v390
          %v398 = vmul.f32 %v393, %v393
          %v399 = vadd.f32 %v397, %v398
          %v400 = vmul.f32 %v396, %v396
          %v401 = vadd.f32 %v399, %v400
          %v402 = vmax.f32 %v401, 1e-10
          %v403 = vrsqrt.pop %v402
          %v404 = vmul.f32 %v403, %v402
          %v405 = vmul.f32 %v404, %v403
          %v406 = vmul.f32 0.5, %v405
          %v407 = vsub.f32 1.5, %v406
          %v408 = vmul.f32 %v403, %v407
          %vm409 = vweird.f32 %v402
          %vm410 = vweird.f32 %v403
          %vm411 = vmor %vm409, %vm410
          %v412 = vsel %vm411, %v403, %v408
          %v413 = vmul.f32 %v390, %v412
          %v414 = vsel %vm387, %v413, %v349
          %v415 = vmul.f32 %v393, %v412
          %v416 = vsel %vm387, %v415, %v350
          %v417 = vmul.f32 %v396, %v412
          %v418 = vsel %vm387, %v417, %v351
          %v419 = vlaneseq
          %v420 = vand.u32 %v419, 127
          %vm421 = vcmp.eq.s32.totalorder %v420, 0
          %v422 = vsel %vm421, %v414, 0.0
          %vm423 = vcmp.eq.s32.totalorder %v420, 1
          %v424 = vsel %vm423, %v377, %v422
          %vm425 = vcmp.eq.s32.totalorder %v420, 2
          %v426 = vsel %vm425, %v330, %v424
          %vm427 = vcmp.eq.s32.totalorder %v420, 3
          %v428 = vsel %vm427, %v416, %v426
          %vm429 = vcmp.eq.s32.totalorder %v420, 4
          %v430 = vsel %vm429, %v378, %v428
          %vm431 = vcmp.eq.s32.totalorder %v420, 5
          %v432 = vsel %vm431, %v331, %v430
          %vm433 = vcmp.eq.s32.totalorder %v420, 6
          %v434 = vsel %vm433, %v418, %v432
          %vm435 = vcmp.eq.s32.totalorder %v420, 7
          %v436 = vsel %vm435, %v379, %v434
          %vm437 = vcmp.eq.s32.totalorder %v420, 8
          %v438 = vsel %vm437, %v332, %v436
          %439 = vst [vmem:[%s296] sm:$0xff] %v438
        $region48: #{tpu_custom_call.1} parent=31 // pred_fallthru
          _
        %v440 = vld [vmem:[%s250] sm:$0xff]
        %v441 = vld [vmem:[%s260] sm:$0xff]
        %v442 = vsub.f32 %v440, %v441
        %v443 = vld [vmem:[#allocation2] sm:$0xff]
        %v444 = vmul.f32 %v442, %v442
        %v445 = vadd.f32 %v443, %v444
        %vm446 = vcmask 523264
        %447 = vst.msk [vmem:[#allocation2] sm:$0xff] %vm446, %v445
        // Predicated region
        $region49: #{tpu_custom_call.1} parent=31 // pred_check
          %p448 = pneg %p299
        $region50: #{tpu_custom_call.1} parent=31 // pred_check_branch
          %450 = sbr.rel (%p448) target = $region52
        $region51: #{tpu_custom_call.1} parent=31 // pred_region
          %v451 = vld [vmem:[#allocation2] sm:$0xff]
          %v452 = vsel %vm446, %v451, 0.0
          %453 = vadd.xlane.f32.xlu0 %v452
          %v454 = vpop.xlane.xlu0 %453
          %v455 = vrot.slane %v454, 4
          %v456 = vadd.f32 %v454, %v455
          %v457 = vrot.slane %v456, 2
          %v458 = vadd.f32 %v456, %v457
          %v459 = vrot.slane %v458, 1
          %v460 = vadd.f32 %v458, %v459
          %s461 = vtos %v460
          %v462 = vstv %s461
          %463 = vst [vmem:[%s289] sm:$0xff] %v462
        $region52: #{tpu_custom_call.1} parent=31 // pred_fallthru
          _
        %s464 = sand.u32 %s126, 1
        %s465 = scalar_lea.sflag [#allocation5], %s464
        %s466 = sand.u32 %s126, 1
        %s467 = smul.addr %s466, 8
        %s468 = scalar_lea.vmem [#allocation10], %s467
        %s469 = sand.u32 %s152, 1
        %s470 = scalar_lea.sflag [#allocation12], %s469
        %s471 = sand.u32 %s152, 1
        %s472 = smul.addr %s471, 8
        %s473 = scalar_lea.vmem [#allocation11], %s472
        // Predicated region
        $region53: #{tpu_custom_call.1} parent=31 // pred_check
          %p474 = pneg %p136
        $region54: #{tpu_custom_call.1} parent=31 // pred_check_branch
          %476 = sbr.rel (%p474) target = $region56
        $region55: #{tpu_custom_call.1} parent=31 // pred_region
          %478 = vsyncadd %s465, 0
          %s479 = smul.addr %s33, 8
          %s480 = scalar_lea.hbm %s3, %s479
          %s482 = sshll.u32 %s468, 4
          %s483 = int_to_ptr.vmem [resolvable:$true] %s482
          %s484 = sshll.u32 %s480, 4
          %s485 = int_to_ptr.hbm [resolvable:$true] %s484
          %487 = dma.vmem_to_hbm [thread:$0]  %s483, 128, %s485, %s465
        $region56: #{tpu_custom_call.1} parent=31 // pred_fallthru
          _
        // Predicated region
        $region57: #{tpu_custom_call.1} parent=31 // pred_check
          %p488 = pneg %p162
        $region58: #{tpu_custom_call.1} parent=31 // pred_check_branch
          %490 = sbr.rel (%p488) target = $region60
        $region59: #{tpu_custom_call.1} parent=31 // pred_region
          %492 = vsyncadd %s470, 0
          %s493 = smul.addr %s33, 8
          %s494 = scalar_lea.hbm %s4, %s493
          %s496 = sshll.u32 %s473, 4
          %s497 = int_to_ptr.vmem [resolvable:$true] %s496
          %s498 = sshll.u32 %s494, 4
          %s499 = int_to_ptr.hbm [resolvable:$true] %s498
          %501 = dma.vmem_to_hbm [thread:$0]  %s497, 128, %s499, %s470
        $region60: #{tpu_custom_call.1} parent=31 // pred_fallthru
          _
      $region32: #{tpu_custom_call.1} parent=5 // pred_fallthru
        _
      %p502 = scmp.le.s32.totalorder 2, %s24
      // Predicated region
      $region61: #{tpu_custom_call.1} parent=5 // pred_check
        %p503 = pneg %p502
      $region62: #{tpu_custom_call.1} parent=5 // pred_check_branch
        %505 = sbr.rel (%p503) target = $region64
      $region63: #{tpu_custom_call.1} parent=5 // pred_region
        %s506 = ssub.s32 %s24, 2
        // Predicated region
        $region65: #{tpu_custom_call.1} parent=63 // pred_check
          %p507 = pneg %p142
        $region66: #{tpu_custom_call.1} parent=63 // pred_check_branch
          %509 = sbr.rel (%p507) target = $region68
        $region67: #{tpu_custom_call.1} parent=63 // pred_region
          %s510 = sand.u32 %s127, 1
          %s511 = scalar_lea.sflag [#allocation5], %s510
          %s512 = sand.u32 %s127, 1
          %s513 = smul.addr %s512, 8
          %s514 = scalar_lea.vmem [#allocation10], %s513
          %516 = dma.done %s511, 128
        $region68: #{tpu_custom_call.1} parent=63 // pred_fallthru
          _
        // Predicated region
        $region69: #{tpu_custom_call.1} parent=63 // pred_check
          %p517 = pneg %p168
        $region70: #{tpu_custom_call.1} parent=63 // pred_check_branch
          %519 = sbr.rel (%p517) target = $region72
        $region71: #{tpu_custom_call.1} parent=63 // pred_region
          %s520 = sand.u32 %s153, 1
          %s521 = scalar_lea.sflag [#allocation12], %s520
          %s522 = sand.u32 %s153, 1
          %s523 = smul.addr %s522, 8
          %s524 = scalar_lea.vmem [#allocation11], %s523
          %526 = dma.done %s521, 128
        $region72: #{tpu_custom_call.1} parent=63 // pred_fallthru
          _
      $region64: #{tpu_custom_call.1} parent=5 // pred_fallthru
        _
    $region6: #{tpu_custom_call.1} parent=1 // loop_footer
      %s28 = sadd.s32 1, %s24
    $region7: #{tpu_custom_call.1} parent=1 // loop_footer_branch
      %23 = sbr.rel target = $region3
    $region8: #{tpu_custom_call.1} parent=1 // loop_exit
      _
    %527 = vsyncpa [#allocation4], 1
    %s528 = scalar_lea.sflag [#allocation4], 1
    %529 = vsyncpa %s528, 1
    %530 = vsyncpa [#allocation9], 1
    %s531 = scalar_lea.sflag [#allocation9], 1
    %532 = vsyncpa %s531, 1
    %533 = vsyncpa [#allocation5], 1
    %s534 = scalar_lea.sflag [#allocation5], 1
    %535 = vsyncpa %s534, 1
    %536 = vsyncpa [#allocation12], 1
    %s537 = scalar_lea.sflag [#allocation12], 1
    %538 = vsyncpa %s537, 1
    %539 = vsyncpa [#allocation6], 1
    %s540 = scalar_lea.sflag [#allocation6], 1
    %541 = vsyncpa %s540, 1

</llo_original>
